<compile_context>
chip_gen: v5e
topology: v5e:2x2
jax: 0.10.0
libtpu: 0.0.40
codegen_flags: <defaults>
</compile_context>

<pallas_src>
import math

import jax
import jax.numpy as jnp
from jax import lax
from jax.experimental import pallas as pl
from jax.experimental.pallas import tpu as pltpu  # noqa: F401  (TPU backend)

# Small, module-consistent shapes.
B, S, D = 2, 8, 32          # batch, seq, d_model (hidden_size)
H = 4                       # heads_count
DK = D // H                 # d_key
F_HID = 64                  # ff_hidden_size
EPS = 1e-6
BS = B * S                  # flattened rows

# ---- packed weight slab column layout: (D, 256) -------------------------
_WQKV = slice(0, 3 * D)                            # fused Q|K|V projection
_WO   = slice(3 * D, 4 * D)                        # output projection
_W1   = slice(4 * D, 4 * D + F_HID)                # ff up-projection
_W2T  = slice(4 * D + F_HID, 4 * D + 2 * F_HID)    # ff down-projection (transposed)
W_COLS = 4 * D + 2 * F_HID                         # 256 (lane-dense)

# ---- packed bias / layer-norm slab layout: (1, 352) ---------------------
_BQKV = slice(0, 3 * D)
_BO   = slice(3 * D, 4 * D)
_B1   = slice(4 * D, 4 * D + F_HID)
_B2   = slice(4 * D + F_HID, 5 * D + F_HID)
_LN1A = slice(5 * D + F_HID, 6 * D + F_HID)
_LN1B = slice(6 * D + F_HID, 7 * D + F_HID)
_LN2A = slice(7 * D + F_HID, 8 * D + F_HID)
_LN2B = slice(8 * D + F_HID, 9 * D + F_HID)
V_COLS = 9 * D + F_HID                             # 352


def _layer_norm(x, gamma, beta):
    # matches LayerNormalization.forward (unbiased std, divide by std+eps)
    mean = jnp.mean(x, axis=-1, keepdims=True)
    diff = x - mean
    var = jnp.sum(diff * diff, axis=-1, keepdims=True) / (x.shape[-1] - 1)
    std = jnp.sqrt(var)
    return gamma * diff / (std + EPS) + beta


def _gelu_tanh(x):
    c = math.sqrt(2.0 / math.pi)
    return 0.5 * x * (1.0 + jnp.tanh(c * (x + 0.044715 * x * x * x)))


def encoder_layer_kernel(x_ref, w_ref, v_ref, mask_ref, out_ref):
    x = x_ref[...]                                                  # (BS, D)

    # ----- fused Q/K/V projection: one (BS,D)x(D,3D) MXU op -----
    qkv = (jnp.dot(x, w_ref[:, _WQKV], preferred_element_type=jnp.float32)
           + v_ref[:, _BQKV])                                       # (BS, 3D)
    q = qkv[:, 0:D].reshape(B, S, D)
    k = qkv[:, D:2 * D].reshape(B, S, D)
    v = qkv[:, 2 * D:3 * D].reshape(B, S, D)

    # Reference uses the raw scaled scores (softmax discarded by dropout in
    # eval mode), so attention is linear per head:
    #   ctx_h = (Q_h K_h^T / sqrt(dk)) V_h = Q_h (K_h^T V_h) / sqrt(dk)
    # => ctx = Q @ (head_mask * (K^T V)),  head_mask precomputed on host.
    ktv = jnp.einsum("bsd,bse->bde", k, v,
                     preferred_element_type=jnp.float32)            # (B, D, D)
    ctx = jnp.einsum("bsd,bde->bse", q, mask_ref[...] * ktv,
                     preferred_element_type=jnp.float32)            # (B, S, D)
    ctx = ctx.reshape(BS, D)

    attn_out = (jnp.dot(ctx, w_ref[:, _WO],
                        preferred_element_type=jnp.float32) + v_ref[:, _BO])

    # ----- input sublayer: residual then post-LayerNorm (dropout = identity) -----
    x1 = _layer_norm(x + attn_out, v_ref[:, _LN1A], v_ref[:, _LN1B])

    # ----- positionwise feed-forward (W2 stored transposed: contract dim 1) -----
    h1 = (jnp.dot(x1, w_ref[:, _W1],
                  preferred_element_type=jnp.float32) + v_ref[:, _B1])
    ff = (lax.dot_general(_gelu_tanh(h1), w_ref[:, _W2T],
                          (((1,), (1,)), ((), ())),
                          preferred_element_type=jnp.float32) + v_ref[:, _B2])

    # ----- output sublayer -----
    out_ref[...] = _layer_norm(x1 + ff, v_ref[:, _LN2A], v_ref[:, _LN2B])


def prepare_params(p):
    """One-time host-side packing of all weights into 3 DMA-friendly slabs."""
    w_slab = jnp.concatenate(
        [p["wq"], p["wk"], p["wv"], p["wo"], p["w1"], p["w2"].T], axis=1)   # (D, 256)
    vec = jnp.concatenate(
        [p["bq"], p["bk"], p["bv"], p["bo"], p["b1"], p["b2"],
         p["ln1_a"], p["ln1_b"], p["ln2_a"], p["ln2_b"]], axis=1)           # (1, 352)
    head = jnp.arange(D, dtype=jnp.int32) // DK
    mask = jnp.where(head[:, None] == head[None, :],
                     1.0 / math.sqrt(DK), 0.0).astype(jnp.float32)          # (D, D)
    return {"w": w_slab, "vec": vec, "mask": mask}


def encoder_layer(x, prepped):
    """x: (B, S, D) float32; prepped: output of prepare_params (packed slabs)."""
    x_flat = x.reshape(BS, D)

    flops = (2 * BS * D * (3 * D)        # fused QKV projection
             + 2 * 2 * B * S * D * D     # batched K^T V  and  Q @ (mask * K^T V)
             + 2 * BS * D * D            # output projection
             + 2 * 2 * BS * D * F_HID)   # both feed-forward matmuls
    transcendentals = BS * F_HID         # tanh in GELU
    bytes_accessed = 4 * (BS * D + D * W_COLS + V_COLS + D * D + BS * D)

    out_flat = pl.pallas_call(
        encoder_layer_kernel,
        out_shape=jax.ShapeDtypeStruct((BS, D), jnp.float32),
        cost_estimate=pl.CostEstimate(
            flops=flops,
            transcendentals=transcendentals,
            bytes_accessed=bytes_accessed),
    )(x_flat, prepped["w"], prepped["vec"], prepped["mask"])
    return out_flat.reshape(B, S, D)


def encoder_layer_ref(x, p):
    """Pure-JAX reference mirroring the PyTorch forward (eval mode)."""
    def mha(xb):
        q = xb @ p["wq"] + p["bq"]
        k = xb @ p["wk"] + p["bk"]
        v = xb @ p["wv"] + p["bv"]

        def split(t):  # (B,S,D) -> (B,H,S,DK)
            return t.reshape(B, S, H, DK).transpose(0, 2, 1, 3)

        qh, kh, vh = split(q), split(k), split(v)
        scores = jnp.einsum("bhqd,bhkd->bhqk", qh, kh) / math.sqrt(DK)
        probs = scores  # softmax discarded by dropout(attention_scores) in eval mode
        ctx = jnp.einsum("bhqk,bhkd->bhqd", probs, vh)
        ctx = ctx.transpose(0, 2, 1, 3).reshape(B, S, D)
        return ctx @ p["wo"] + p["bo"]

    x1 = _layer_norm(x + mha(x), p["ln1_a"], p["ln1_b"])
    ff = _gelu_tanh(x1 @ p["w1"] + p["b1"]) @ p["w2"] + p["b2"]
    return _layer_norm(x1 + ff, p["ln2_a"], p["ln2_b"])


def make_params(key):
    ks = jax.random.split(key, 12)
    s = 0.1
    return {
        "wq": s * jax.random.normal(ks[0], (D, D), jnp.float32),
        "bq": s * jax.random.normal(ks[1], (1, D), jnp.float32),
        "wk": s * jax.random.normal(ks[2], (D, D), jnp.float32),
        "bk": s * jax.random.normal(ks[3], (1, D), jnp.float32),
        "wv": s * jax.random.normal(ks[4], (D, D), jnp.float32),
        "bv": s * jax.random.normal(ks[5], (1, D), jnp.float32),
        "wo": s * jax.random.normal(ks[6], (D, D), jnp.float32),
        "bo": s * jax.random.normal(ks[7], (1, D), jnp.float32),
        "ln1_a": jnp.ones((1, D), jnp.float32),
        "ln1_b": jnp.zeros((1, D), jnp.float32),
        "w1": s * jax.random.normal(ks[8], (D, F_HID), jnp.float32),
        "b1": s * jax.random.normal(ks[9], (1, F_HID), jnp.float32),
        "w2": s * jax.random.normal(ks[10], (F_HID, D), jnp.float32),
        "b2": s * jax.random.normal(ks[11], (1, D), jnp.float32),
        "ln2_a": jnp.ones((1, D), jnp.float32),
        "ln2_b": jnp.zeros((1, D), jnp.float32),
    }


if __name__ == "__main__":
    key = jax.random.PRNGKey(0)
    kx, kp = jax.random.split(key)
    x = jax.random.normal(kx, (B, S, D), jnp.float32)
    params = make_params(kp)

    # One-time init: fuse / pack weights and constants (not in the per-call path).
    prepped = prepare_params(params)

    fwd = jax.jit(encoder_layer)
    out = jax.block_until_ready(fwd(x, prepped))

    ref = encoder_layer_ref(x, params)
    assert out.shape == (B, S, D)
    assert jnp.allclose(out, ref, rtol=1e-4, atol=1e-4), (
        f"max abs diff = {jnp.max(jnp.abs(out - ref))}"
    )
    print("KERNEL_OK")
</pallas_src>

<mosaic_0001>
module attributes {stable_mosaic.version = 11 : i64} {
  func.func @encoder_layer_kernel(%arg0: memref<16x32xf32, #tpu.memory_space<vmem>>, %arg1: memref<32x256xf32, #tpu.memory_space<vmem>>, %arg2: memref<1x352xf32, #tpu.memory_space<vmem>>, %arg3: memref<32x32xf32, #tpu.memory_space<vmem>>, %arg4: memref<16x32xf32, #tpu.memory_space<vmem>>) attributes {dimension_semantics = [], scalar_prefetch = 0 : i64, scratch_operands = 0 : i64, tpu.core_type = #tpu.core_type<tc>} {
    %c0 = arith.constant 0 : index
    %c0_0 = arith.constant 0 : index
    %0 = vector.load %arg0[%c0, %c0_0] : memref<16x32xf32, #tpu.memory_space<vmem>>, vector<16x32xf32>
    %c0_1 = arith.constant 0 : index
    %c0_2 = arith.constant 0 : index
    %1 = vector.load %arg1[%c0_1, %c0_2] : memref<32x256xf32, #tpu.memory_space<vmem>>, vector<32x96xf32>
    %cst = arith.constant dense<0.000000e+00> : vector<16x96xf32>
    %2 = tpu.matmul %0, %1, %cst {dimension_numbers = #tpu.dot_dimension_numbers<[1], [0], [0], [1], [0, 0, 1, 1], [], []>} : vector<16x32xf32>, vector<32x96xf32>, vector<16x96xf32> -> vector<16x96xf32>
    %c0_3 = arith.constant 0 : index
    %c0_4 = arith.constant 0 : index
    %3 = vector.load %arg2[%c0_3, %c0_4] : memref<1x352xf32, #tpu.memory_space<vmem>>, vector<1x96xf32>
    %4 = vector.broadcast %3 : vector<1x96xf32> to vector<16x96xf32>
    %5 = arith.addf %2, %4 : vector<16x96xf32>
    %6 = vector.extract_strided_slice %5 {offsets = [0, 0], sizes = [16, 32], strides = [1, 1]} : vector<16x96xf32> to vector<16x32xf32>
    %7 = vector.shape_cast %6 : vector<16x32xf32> to vector<2x8x32xf32>
    %8 = vector.extract_strided_slice %5 {offsets = [0, 32], sizes = [16, 32], strides = [1, 1]} : vector<16x96xf32> to vector<16x32xf32>
    %9 = vector.shape_cast %8 : vector<16x32xf32> to vector<2x8x32xf32>
    %10 = vector.extract_strided_slice %5 {offsets = [0, 64], sizes = [16, 32], strides = [1, 1]} : vector<16x96xf32> to vector<16x32xf32>
    %11 = vector.shape_cast %10 : vector<16x32xf32> to vector<2x8x32xf32>
    "tpu.trace_start"() <{level = 10 : i32, message = "bsd,bse->bde"}> : () -> ()
    %cst_5 = arith.constant dense<0.000000e+00> : vector<2x32x32xf32>
    %12 = tpu.matmul %9, %11, %cst_5 {dimension_numbers = #tpu.dot_dimension_numbers<[1], [1], [2], [2], [0, 0, 0, 2, 1, 2], [0], [0]>} : vector<2x8x32xf32>, vector<2x8x32xf32>, vector<2x32x32xf32> -> vector<2x32x32xf32>
    "tpu.trace_stop"() : () -> ()
    %c0_6 = arith.constant 0 : index
    %c0_7 = arith.constant 0 : index
    %13 = vector.load %arg3[%c0_6, %c0_7] : memref<32x32xf32, #tpu.memory_space<vmem>>, vector<32x32xf32>
    %14 = vector.shape_cast %13 : vector<32x32xf32> to vector<1x32x32xf32>
    %15 = vector.broadcast %14 : vector<1x32x32xf32> to vector<2x32x32xf32>
    %16 = arith.mulf %15, %12 : vector<2x32x32xf32>
    "tpu.trace_start"() <{level = 10 : i32, message = "bsd,bde->bse"}> : () -> ()
    %cst_8 = arith.constant dense<0.000000e+00> : vector<2x8x32xf32>
    %17 = tpu.matmul %7, %16, %cst_8 {dimension_numbers = #tpu.dot_dimension_numbers<[2], [1], [1], [2], [0, 0, 0, 1, 1, 2], [0], [0]>} : vector<2x8x32xf32>, vector<2x32x32xf32>, vector<2x8x32xf32> -> vector<2x8x32xf32>
    "tpu.trace_stop"() : () -> ()
    %18 = vector.shape_cast %17 : vector<2x8x32xf32> to vector<16x32xf32>
    %c0_9 = arith.constant 0 : index
    %c96 = arith.constant 96 : index
    %19 = vector.load %arg1[%c0_9, %c96] : memref<32x256xf32, #tpu.memory_space<vmem>>, vector<32x32xf32>
    %cst_10 = arith.constant dense<0.000000e+00> : vector<16x32xf32>
    %20 = tpu.matmul %18, %19, %cst_10 {dimension_numbers = #tpu.dot_dimension_numbers<[1], [0], [0], [1], [0, 0, 1, 1], [], []>} : vector<16x32xf32>, vector<32x32xf32>, vector<16x32xf32> -> vector<16x32xf32>
    %c0_11 = arith.constant 0 : index
    %c96_12 = arith.constant 96 : index
    %21 = vector.load %arg2[%c0_11, %c96_12] : memref<1x352xf32, #tpu.memory_space<vmem>>, vector<1x32xf32>
    %22 = vector.broadcast %21 : vector<1x32xf32> to vector<16x32xf32>
    %23 = arith.addf %20, %22 : vector<16x32xf32>
    %24 = arith.addf %0, %23 : vector<16x32xf32>
    %c0_13 = arith.constant 0 : index
    %c224 = arith.constant 224 : index
    %25 = vector.load %arg2[%c0_13, %c224] : memref<1x352xf32, #tpu.memory_space<vmem>>, vector<1x32xf32>
    %c0_14 = arith.constant 0 : index
    %c256 = arith.constant 256 : index
    %26 = vector.load %arg2[%c0_14, %c256] : memref<1x352xf32, #tpu.memory_space<vmem>>, vector<1x32xf32>
    %cst_15 = arith.constant dense<0.000000e+00> : vector<16xf32>
    %27 = vector.multi_reduction <add>, %24, %cst_15 [1] : vector<16x32xf32> to vector<16xf32>
    %28 = vector.shape_cast %27 : vector<16xf32> to vector<16x1xf32>
    %cst_16 = arith.constant 3.200000e+01 : f32
    %29 = vector.broadcast %cst_16 : f32 to vector<16x1xf32>
    %30 = arith.divf %28, %29 : vector<16x1xf32>
    %31 = vector.broadcast %30 : vector<16x1xf32> to vector<16x32xf32>
    %32 = arith.subf %24, %31 : vector<16x32xf32>
    %33 = arith.mulf %32, %32 : vector<16x32xf32>
    %cst_17 = arith.constant dense<0.000000e+00> : vector<16xf32>
    %34 = vector.multi_reduction <add>, %33, %cst_17 [1] : vector<16x32xf32> to vector<16xf32>
    %35 = vector.shape_cast %34 : vector<16xf32> to vector<16x1xf32>
    %cst_18 = arith.constant 3.100000e+01 : f32
    %36 = vector.broadcast %cst_18 : f32 to vector<16x1xf32>
    %37 = arith.divf %35, %36 : vector<16x1xf32>
    %38 = math.sqrt %37 : vector<16x1xf32>
    %39 = vector.broadcast %25 : vector<1x32xf32> to vector<16x32xf32>
    %40 = arith.mulf %39, %32 : vector<16x32xf32>
    %cst_19 = arith.constant 9.99999997E-7 : f32
    %41 = vector.broadcast %cst_19 : f32 to vector<16x1xf32>
    %42 = arith.addf %38, %41 : vector<16x1xf32>
    %43 = vector.broadcast %42 : vector<16x1xf32> to vector<16x32xf32>
    %44 = arith.divf %40, %43 : vector<16x32xf32>
    %45 = vector.broadcast %26 : vector<1x32xf32> to vector<16x32xf32>
    %46 = arith.addf %44, %45 : vector<16x32xf32>
    %c0_20 = arith.constant 0 : index
    %c128 = arith.constant 128 : index
    %47 = vector.load %arg1[%c0_20, %c128] : memref<32x256xf32, #tpu.memory_space<vmem>>, vector<32x64xf32>
    %cst_21 = arith.constant dense<0.000000e+00> : vector<16x64xf32>
    %48 = tpu.matmul %46, %47, %cst_21 {dimension_numbers = #tpu.dot_dimension_numbers<[1], [0], [0], [1], [0, 0, 1, 1], [], []>} : vector<16x32xf32>, vector<32x64xf32>, vector<16x64xf32> -> vector<16x64xf32>
    %c0_22 = arith.constant 0 : index
    %c128_23 = arith.constant 128 : index
    %49 = vector.load %arg2[%c0_22, %c128_23] : memref<1x352xf32, #tpu.memory_space<vmem>>, vector<1x64xf32>
    %50 = vector.broadcast %49 : vector<1x64xf32> to vector<16x64xf32>
    %51 = arith.addf %48, %50 : vector<16x64xf32>
    %cst_24 = arith.constant 5.000000e-01 : f32
    %52 = vector.broadcast %cst_24 : f32 to vector<16x64xf32>
    %53 = arith.mulf %52, %51 : vector<16x64xf32>
    %cst_25 = arith.constant 4.471500e-02 : f32
    %54 = vector.broadcast %cst_25 : f32 to vector<16x64xf32>
    %55 = arith.mulf %54, %51 : vector<16x64xf32>
    %56 = arith.mulf %55, %51 : vector<16x64xf32>
    %57 = arith.mulf %56, %51 : vector<16x64xf32>
    %58 = arith.addf %51, %57 : vector<16x64xf32>
    %cst_26 = arith.constant 0.797884583 : f32
    %59 = vector.broadcast %cst_26 : f32 to vector<16x64xf32>
    %60 = arith.mulf %59, %58 : vector<16x64xf32>
    %61 = math.tanh %60 : vector<16x64xf32>
    %cst_27 = arith.constant 1.000000e+00 : f32
    %62 = vector.broadcast %cst_27 : f32 to vector<16x64xf32>
    %63 = arith.addf %62, %61 : vector<16x64xf32>
    %64 = arith.mulf %53, %63 : vector<16x64xf32>
    %c0_28 = arith.constant 0 : index
    %c192 = arith.constant 192 : index
    %65 = vector.load %arg1[%c0_28, %c192] : memref<32x256xf32, #tpu.memory_space<vmem>>, vector<32x64xf32>
    %cst_29 = arith.constant dense<0.000000e+00> : vector<16x32xf32>
    %66 = tpu.matmul %64, %65, %cst_29 {dimension_numbers = #tpu.dot_dimension_numbers<[1], [1], [0], [0], [0, 0, 1, 0], [], []>} : vector<16x64xf32>, vector<32x64xf32>, vector<16x32xf32> -> vector<16x32xf32>
    %c0_30 = arith.constant 0 : index
    %c192_31 = arith.constant 192 : index
    %67 = vector.load %arg2[%c0_30, %c192_31] : memref<1x352xf32, #tpu.memory_space<vmem>>, vector<1x32xf32>
    %68 = vector.broadcast %67 : vector<1x32xf32> to vector<16x32xf32>
    %69 = arith.addf %66, %68 : vector<16x32xf32>
    %70 = arith.addf %46, %69 : vector<16x32xf32>
    %c0_32 = arith.constant 0 : index
    %c288 = arith.constant 288 : index
    %71 = vector.load %arg2[%c0_32, %c288] : memref<1x352xf32, #tpu.memory_space<vmem>>, vector<1x32xf32>
    %c0_33 = arith.constant 0 : index
    %c320 = arith.constant 320 : index
    %72 = vector.load %arg2[%c0_33, %c320] : memref<1x352xf32, #tpu.memory_space<vmem>>, vector<1x32xf32>
    %cst_34 = arith.constant dense<0.000000e+00> : vector<16xf32>
    %73 = vector.multi_reduction <add>, %70, %cst_34 [1] : vector<16x32xf32> to vector<16xf32>
    %74 = vector.shape_cast %73 : vector<16xf32> to vector<16x1xf32>
    %cst_35 = arith.constant 3.200000e+01 : f32
    %75 = vector.broadcast %cst_35 : f32 to vector<16x1xf32>
    %76 = arith.divf %74, %75 : vector<16x1xf32>
    %77 = vector.broadcast %76 : vector<16x1xf32> to vector<16x32xf32>
    %78 = arith.subf %70, %77 : vector<16x32xf32>
    %79 = arith.mulf %78, %78 : vector<16x32xf32>
    %cst_36 = arith.constant dense<0.000000e+00> : vector<16xf32>
    %80 = vector.multi_reduction <add>, %79, %cst_36 [1] : vector<16x32xf32> to vector<16xf32>
    %81 = vector.shape_cast %80 : vector<16xf32> to vector<16x1xf32>
    %cst_37 = arith.constant 3.100000e+01 : f32
    %82 = vector.broadcast %cst_37 : f32 to vector<16x1xf32>
    %83 = arith.divf %81, %82 : vector<16x1xf32>
    %84 = math.sqrt %83 : vector<16x1xf32>
    %85 = vector.broadcast %71 : vector<1x32xf32> to vector<16x32xf32>
    %86 = arith.mulf %85, %78 : vector<16x32xf32>
    %cst_38 = arith.constant 9.99999997E-7 : f32
    %87 = vector.broadcast %cst_38 : f32 to vector<16x1xf32>
    %88 = arith.addf %84, %87 : vector<16x1xf32>
    %89 = vector.broadcast %88 : vector<16x1xf32> to vector<16x32xf32>
    %90 = arith.divf %86, %89 : vector<16x32xf32>
    %91 = vector.broadcast %72 : vector<1x32xf32> to vector<16x32xf32>
    %92 = arith.addf %90, %91 : vector<16x32xf32>
    %c0_39 = arith.constant 0 : index
    %c0_40 = arith.constant 0 : index
    %93 = vector.load %arg4[%c0_39, %c0_40] : memref<16x32xf32, #tpu.memory_space<vmem>>, vector<16x32xf32>
    tpu.vector_store %arg4[%c0_39, %c0_40], %92 {strides = array<i32>} : memref<16x32xf32, #tpu.memory_space<vmem>>, vector<16x32xf32>,
    return
  }
}

</mosaic_0001>

<llo_original>
// kernel: encoder_layer.1
$region0: #{encoder_layer.1}
  #allocation0 [shape = 'u32[]', space=smem, size = 0x4, offset = 0x4, fixed_abs, tag = 'smem constant byte address 0x4 - core index']
  #allocation1 [shape = 'u32[72,128]{1,0:T(1,128)}', space=vmem, size = 0x9000, scoped, tag = 'internal scratch']
  %s0 = inlined_call_operand.hbm [shape: f32[16,32], index: 0, kind: input, shape index: {}]
  %s1 = inlined_call_operand.hbm [shape: f32[32,256], index: 1, kind: input, shape index: {}]
  %s2 = inlined_call_operand.hbm [shape: f32[1,352], index: 2, kind: input, shape index: {}]
  %s3 = inlined_call_operand.hbm [shape: f32[32,32], index: 3, kind: input, shape index: {}]
  %s4 = inlined_call_operand.hbm [shape: f32[16,32], index: 4, kind: output, shape index: {}]
  %s5 = sld [smem:[#allocation0]]
  $region42: #{encoder_layer.1} parent=0
    _
  %s7 = ssub.s32 1, %s5
  %s8 = scalar_select 0, %s7, %s5
  $region1: #{encoder_layer.1} parent=0
    #allocation2 [shape = 'u8[8192]{0}', space=vmem, size = 0x2000, scoped, tag = 'input window, operand 0, single buffered']
    #allocation3 [shape = 's32[1]{0}', space=sflag, size = 0x4, scoped, tag = 'scoped memory for encoder_layer.1']
    #allocation4 [shape = 's32[1]{0}', space=sflag, size = 0x4, scoped, tag = 'scoped memory for encoder_layer.1']
    #allocation5 [shape = 'u8[32768]{0}', space=vmem, size = 0x8000, scoped, tag = 'input window, operand 1, single buffered']
    #allocation6 [shape = 's32[1]{0}', space=sflag, size = 0x4, scoped, tag = 'scoped memory for encoder_layer.1']
    #allocation7 [shape = 'u8[1536]{0}', space=vmem, size = 0x800, scoped, tag = 'input window, operand 2, single buffered']
    #allocation8 [shape = 'u8[16384]{0}', space=vmem, size = 0x4000, scoped, tag = 'input window, operand 3, single buffered']
    #allocation9 [shape = 's32[1]{0}', space=sflag, size = 0x4, scoped, tag = 'scoped memory for encoder_layer.1']
    #allocation10 [shape = 'u8[8192]{0}', space=vmem, size = 0x2000, scoped, tag = 'output window, operand 0, single buffered']
    %9 = vsyncpa [#allocation3], 0
    %10 = vsyncpa [#allocation6], 0
    %11 = vsyncpa [#allocation9], 0
    %12 = vsyncpa [#allocation4], 0
    // Predicated region
    $region2: #{encoder_layer.1} parent=1 // pred_check
      _
    $region3: #{encoder_layer.1} parent=1 // pred_check_branch
      %14 = sbr.rel (0) target = $region5
    $region4: #{encoder_layer.1} parent=1 // pred_region
      %16 = vsyncadd [#allocation3], 0
      %s17 = sshll.u32 %s0, 4
      %s18 = int_to_ptr.hbm [resolvable:$true] %s17
      %s19 = sshll.u32 [#allocation2], 4
      %s20 = int_to_ptr.vmem [resolvable:$true] %s19
      %25 = dma.hbm_to_vmem [thread:$0]  %s18, 256, %s20, [#allocation3], 128, 128, 8
    $region5: #{encoder_layer.1} parent=1 // pred_fallthru
      _
    // Predicated region
    $region6: #{encoder_layer.1} parent=1 // pred_check
      _
    $region7: #{encoder_layer.1} parent=1 // pred_check_branch
      %27 = sbr.rel (0) target = $region9
    $region8: #{encoder_layer.1} parent=1 // pred_region
      %29 = vsyncadd [#allocation6], 0
      %s30 = sshll.u32 %s1, 4
      %s31 = int_to_ptr.hbm [resolvable:$true] %s30
      %s32 = sshll.u32 [#allocation5], 4
      %s33 = int_to_ptr.vmem [resolvable:$true] %s32
      %38 = dma.hbm_to_vmem [thread:$0]  %s31, 1024, %s33, [#allocation6], 256, 256, 16
    $region9: #{encoder_layer.1} parent=1 // pred_fallthru
      _
    // Predicated region
    $region10: #{encoder_layer.1} parent=1 // pred_check
      _
    $region11: #{encoder_layer.1} parent=1 // pred_check_branch
      %40 = sbr.rel (0) target = $region13
    $region12: #{encoder_layer.1} parent=1 // pred_region
      %42 = vsyncadd [#allocation6], 0
      %s44 = sshll.u32 %s2, 4
      %s45 = int_to_ptr.hbm [resolvable:$true] %s44
      %s46 = sshll.u32 [#allocation7], 4
      %s47 = int_to_ptr.vmem [resolvable:$true] %s46
      %49 = dma.hbm_to_vmem [thread:$0]  %s45, 48, %s47, [#allocation6]
    $region13: #{encoder_layer.1} parent=1 // pred_fallthru
      _
    // Predicated region
    $region14: #{encoder_layer.1} parent=1 // pred_check
      _
    $region15: #{encoder_layer.1} parent=1 // pred_check_branch
      %51 = sbr.rel (0) target = $region17
    $region16: #{encoder_layer.1} parent=1 // pred_region
      %53 = vsyncadd [#allocation9], 0
      %s54 = sshll.u32 %s3, 4
      %s55 = int_to_ptr.hbm [resolvable:$true] %s54
      %s56 = sshll.u32 [#allocation8], 4
      %s57 = int_to_ptr.vmem [resolvable:$true] %s56
      %62 = dma.hbm_to_vmem [thread:$0]  %s55, 512, %s57, [#allocation9], 128, 128, 8
    $region17: #{encoder_layer.1} parent=1 // pred_fallthru
      _
    // Predicated region
    $region18: #{encoder_layer.1} parent=1 // pred_check
      _
    $region19: #{encoder_layer.1} parent=1 // pred_check_branch
      %64 = sbr.rel (0) target = $region21
    $region20: #{encoder_layer.1} parent=1 // pred_region
      %66 = dma.done [#allocation3], 256
    $region21: #{encoder_layer.1} parent=1 // pred_fallthru
      _
    // Predicated region
    $region22: #{encoder_layer.1} parent=1 // pred_check
      _
    $region23: #{encoder_layer.1} parent=1 // pred_check_branch
      %68 = sbr.rel (0) target = $region25
    $region24: #{encoder_layer.1} parent=1 // pred_region
      %70 = dma.done [#allocation6], 1024
    $region25: #{encoder_layer.1} parent=1 // pred_fallthru
      _
    // Predicated region
    $region26: #{encoder_layer.1} parent=1 // pred_check
      _
    $region27: #{encoder_layer.1} parent=1 // pred_check_branch
      %72 = sbr.rel (0) target = $region29
    $region28: #{encoder_layer.1} parent=1 // pred_region
      %74 = dma.done [#allocation6], 48
    $region29: #{encoder_layer.1} parent=1 // pred_fallthru
      _
    // Predicated region
    $region30: #{encoder_layer.1} parent=1 // pred_check
      _
    $region31: #{encoder_layer.1} parent=1 // pred_check_branch
      %76 = sbr.rel (0) target = $region33
    $region32: #{encoder_layer.1} parent=1 // pred_region
      %78 = dma.done [#allocation9], 512
    $region33: #{encoder_layer.1} parent=1 // pred_fallthru
      _
    %v79 = vld [vmem:[#allocation2] sm:$0xff]
    %v80 = vld [vmem:[#allocation2 + $0x8] sm:$0xff]
    %v81 = vld [vmem:[#allocation5] sm:$0xff]
    %v82 = vld [vmem:[#allocation5 + $0x10] sm:$0xff]
    %v83 = vld [vmem:[#allocation5 + $0x20] sm:$0xff]
    %v84 = vld [vmem:[#allocation5 + $0x30] sm:$0xff]
    %v85 = vld [vmem:[#allocation7] sm:$0x1]
    %v87 = vperm.slane %v85, 0
    %vm89 = vcmask 261120
    %v91 = vsel %vm89, %v79, 0
    %v94 = vsel %vm89, %v80, 0
    %96 = vmatpush.msra.mxu0 0.0
    %97 = vmatpush.msra.mxu0 0.0
    %98 = vmatpush.msra.mxu0 0.0
    %99 = vmatpush.msra.mxu0 0.0
    %100 = vmatpush.msra.mxu0 0.0
    %101 = vmatpush.msra.mxu0 0.0
    %102 = vmatpush.msra.mxu0 0.0
    %103 = vmatpush.msra.mxu0 0.0
    %104 = vmatpush.msra.mxu0 0.0
    %105 = vmatpush.msra.mxu0 0.0
    %106 = vmatpush.msra.mxu0 0.0
    %107 = vmatpush.msra.mxu0 0.0
    %108 = vmatpush.msra.mxu0 %v84
    %109 = vmatpush.msra.mxu0 %v83
    %110 = vmatpush.msra.mxu0 %v82
    %111 = vmatpush.msra.mxu0 %v81
    %112 = vmatmul.f32.gmra.mxu0 %v91
    %v113 = vpop.f32.mrf.mxu0
    %v114 = vadd.f32 %v87, %v113
    %115 = vmatmul.f32.gmra.mxu0 %v94
    %v116 = vpop.f32.mrf.mxu0
    %v117 = vadd.f32 %v87, %v116
    %118 = vdwg.mxu0
    %120 = vrot.lane.b32.xlu0 %v114, 96
    %v121 = vpop.permute.xlu0 %120
    %123 = vxpose.xlu0.b32.start [1/16] %v121, 128
    %124 = vxpose.xlu0.b32.cont [2/16] 0.0, 128
    %125 = vxpose.xlu0.b32.cont [3/16] 0.0, 128
    %126 = vxpose.xlu0.b32.cont [4/16] 0.0, 128
    %127 = vxpose.xlu0.b32.cont [5/16] 0.0, 128
    %128 = vxpose.xlu0.b32.cont [6/16] 0.0, 128
    %129 = vxpose.xlu0.b32.cont [7/16] 0.0, 128
    %130 = vxpose.xlu0.b32.cont [8/16] 0.0, 128
    %131 = vxpose.xlu0.b32.cont [9/16] 0.0, 128
    %132 = vxpose.xlu0.b32.cont [10/16] 0.0, 128
    %133 = vxpose.xlu0.b32.cont [11/16] 0.0, 128
    %134 = vxpose.xlu0.b32.cont [12/16] 0.0, 128
    %135 = vxpose.xlu0.b32.cont [13/16] 0.0, 128
    %136 = vxpose.xlu0.b32.cont [14/16] 0.0, 128
    %137 = vxpose.xlu0.b32.cont [15/16] 0.0, 128
    %138 = vxpose.xlu0.b32.end [16/16] 0.0, 128
    %v139 = vpop.trf.xlu0
    %v140 = vpop.trf.xlu0
    %v141 = vpop.trf.xlu0
    %v142 = vpop.trf.xlu0
    %v143 = vpop.trf.xlu0
    %v144 = vpop.trf.xlu0
    %v145 = vpop.trf.xlu0
    %v146 = vpop.trf.xlu0
    %v147 = vpop.trf.xlu0
    %v148 = vpop.trf.xlu0
    %v149 = vpop.trf.xlu0
    %v150 = vpop.trf.xlu0
    %v151 = vpop.trf.xlu0
    %v152 = vpop.trf.xlu0
    %v153 = vpop.trf.xlu0
    %v154 = vpop.trf.xlu0
    %155 = vrot.lane.b32.xlu0 %v114, 64
    %v156 = vpop.permute.xlu0 %155
    %vm158 = vcmask 64512
    %v160 = vsel %vm158, %v139, 0
    %v163 = vsel %vm158, %v140, 0
    %v166 = vsel %vm158, %v141, 0
    %v169 = vsel %vm158, %v142, 0
    %171 = vmatpush.msra.mxu0 0.0
    %172 = vmatpush.msra.mxu0 0.0
    %173 = vmatpush.msra.mxu0 0.0
    %174 = vmatpush.msra.mxu0 0.0
    %175 = vmatpush.msra.mxu0 0.0
    %176 = vmatpush.msra.mxu0 0.0
    %177 = vmatpush.msra.mxu0 0.0
    %178 = vmatpush.msra.mxu0 0.0
    %179 = vmatpush.msra.mxu0 0.0
    %180 = vmatpush.msra.mxu0 0.0
    %181 = vmatpush.msra.mxu0 0.0
    %182 = vmatpush.msra.mxu0 0.0
    %183 = vmatpush.msra.mxu0 0.0
    %184 = vmatpush.msra.mxu0 0.0
    %185 = vmatpush.msra.mxu0 0.0
    %186 = vmatpush.msra.mxu0 %v156
    %187 = vmatmul.f32.gmra.mxu0 %v160
    %v188 = vpop.f32.mrf.mxu0
    %v189 = vadd.f32 0.0, %v188
    %190 = vmatmul.f32.gmra.mxu0 %v163
    %v191 = vpop.f32.mrf.mxu0
    %v192 = vadd.f32 0.0, %v191
    %193 = vmatmul.f32.gmra.mxu0 %v166
    %v194 = vpop.f32.mrf.mxu0
    %v195 = vadd.f32 0.0, %v194
    %196 = vmatmul.f32.gmra.mxu0 %v169
    %v197 = vpop.f32.mrf.mxu0
    %v198 = vadd.f32 0.0, %v197
    %199 = vdwg.mxu0
    %201 = vrot.lane.b32.xlu0 %v117, 96
    %v202 = vpop.permute.xlu0 %201
    %204 = vxpose.xlu0.b32.start [1/16] %v202, 128
    %205 = vxpose.xlu0.b32.cont [2/16] 0.0, 128
    %206 = vxpose.xlu0.b32.cont [3/16] 0.0, 128
    %207 = vxpose.xlu0.b32.cont [4/16] 0.0, 128
    %208 = vxpose.xlu0.b32.cont [5/16] 0.0, 128
    %209 = vxpose.xlu0.b32.cont [6/16] 0.0, 128
    %210 = vxpose.xlu0.b32.cont [7/16] 0.0, 128
    %211 = vxpose.xlu0.b32.cont [8/16] 0.0, 128
    %212 = vxpose.xlu0.b32.cont [9/16] 0.0, 128
    %213 = vxpose.xlu0.b32.cont [10/16] 0.0, 128
    %214 = vxpose.xlu0.b32.cont [11/16] 0.0, 128
    %215 = vxpose.xlu0.b32.cont [12/16] 0.0, 128
    %216 = vxpose.xlu0.b32.cont [13/16] 0.0, 128
    %217 = vxpose.xlu0.b32.cont [14/16] 0.0, 128
    %218 = vxpose.xlu0.b32.cont [15/16] 0.0, 128
    %219 = vxpose.xlu0.b32.end [16/16] 0.0, 128
    %v220 = vpop.trf.xlu0
    %v221 = vpop.trf.xlu0
    %v222 = vpop.trf.xlu0
    %v223 = vpop.trf.xlu0
    %v224 = vpop.trf.xlu0
    %v225 = vpop.trf.xlu0
    %v226 = vpop.trf.xlu0
    %v227 = vpop.trf.xlu0
    %v228 = vpop.trf.xlu0
    %v229 = vpop.trf.xlu0
    %v230 = vpop.trf.xlu0
    %v231 = vpop.trf.xlu0
    %v232 = vpop.trf.xlu0
    %v233 = vpop.trf.xlu0
    %v234 = vpop.trf.xlu0
    %v235 = vpop.trf.xlu0
    %236 = vrot.lane.b32.xlu0 %v117, 64
    %v237 = vpop.permute.xlu0 %236
    %v240 = vsel %vm158, %v220, 0
    %v243 = vsel %vm158, %v221, 0
    %v246 = vsel %vm158, %v222, 0
    %v249 = vsel %vm158, %v223, 0
    %251 = vmatpush.msra.mxu0 0.0
    %252 = vmatpush.msra.mxu0 0.0
    %253 = vmatpush.msra.mxu0 0.0
    %254 = vmatpush.msra.mxu0 0.0
    %255 = vmatpush.msra.mxu0 0.0
    %256 = vmatpush.msra.mxu0 0.0
    %257 = vmatpush.msra.mxu0 0.0
    %258 = vmatpush.msra.mxu0 0.0
    %259 = vmatpush.msra.mxu0 0.0
    %260 = vmatpush.msra.mxu0 0.0
    %261 = vmatpush.msra.mxu0 0.0
    %262 = vmatpush.msra.mxu0 0.0
    %263 = vmatpush.msra.mxu0 0.0
    %264 = vmatpush.msra.mxu0 0.0
    %265 = vmatpush.msra.mxu0 0.0
    %266 = vmatpush.msra.mxu0 %v237
    %267 = vmatmul.f32.gmra.mxu0 %v240
    %v268 = vpop.f32.mrf.mxu0
    %v269 = vadd.f32 0.0, %v268
    %270 = vmatmul.f32.gmra.mxu0 %v243
    %v271 = vpop.f32.mrf.mxu0
    %v272 = vadd.f32 0.0, %v271
    %273 = vmatmul.f32.gmra.mxu0 %v246
    %v274 = vpop.f32.mrf.mxu0
    %v275 = vadd.f32 0.0, %v274
    %276 = vmatmul.f32.gmra.mxu0 %v249
    %v277 = vpop.f32.mrf.mxu0
    %v278 = vadd.f32 0.0, %v277
    %279 = vdwg.mxu0
    %v280 = vld [vmem:[#allocation8] sm:$0xff]
    %v281 = vld [vmem:[#allocation8 + $0x8] sm:$0xff]
    %v282 = vld [vmem:[#allocation8 + $0x10] sm:$0xff]
    %v283 = vld [vmem:[#allocation8 + $0x18] sm:$0xff]
    %v284 = vmul.f32 %v280, %v189
    %v285 = vmul.f32 %v281, %v192
    %v286 = vmul.f32 %v282, %v195
    %v287 = vmul.f32 %v283, %v198
    %v288 = vmul.f32 %v280, %v269
    %v289 = vmul.f32 %v281, %v272
    %v290 = vmul.f32 %v282, %v275
    %v291 = vmul.f32 %v283, %v278
    %v292 = vsel %vm89, %v114, 0
    %294 = vmatpush.msra.mxu0 0.0
    %295 = vmatpush.msra.mxu0 0.0
    %296 = vmatpush.msra.mxu0 0.0
    %297 = vmatpush.msra.mxu0 0.0
    %298 = vmatpush.msra.mxu0 0.0
    %299 = vmatpush.msra.mxu0 0.0
    %300 = vmatpush.msra.mxu0 0.0
    %301 = vmatpush.msra.mxu0 0.0
    %302 = vmatpush.msra.mxu0 0.0
    %303 = vmatpush.msra.mxu0 0.0
    %304 = vmatpush.msra.mxu0 0.0
    %305 = vmatpush.msra.mxu0 0.0
    %306 = vmatpush.msra.mxu0 %v287
    %307 = vmatpush.msra.mxu0 %v286
    %308 = vmatpush.msra.mxu0 %v285
    %309 = vmatpush.msra.mxu0 %v284
    %310 = vmatmul.f32.gmra.mxu0 %v292
    %v311 = vpop.f32.mrf.mxu0
    %v312 = vadd.f32 0.0, %v311
    %313 = vdwg.mxu0
    %v314 = vsel %vm89, %v117, 0
    %316 = vmatpush.msra.mxu0 0.0
    %317 = vmatpush.msra.mxu0 0.0
    %318 = vmatpush.msra.mxu0 0.0
    %319 = vmatpush.msra.mxu0 0.0
    %320 = vmatpush.msra.mxu0 0.0
    %321 = vmatpush.msra.mxu0 0.0
    %322 = vmatpush.msra.mxu0 0.0
    %323 = vmatpush.msra.mxu0 0.0
    %324 = vmatpush.msra.mxu0 0.0
    %325 = vmatpush.msra.mxu0 0.0
    %326 = vmatpush.msra.mxu0 0.0
    %327 = vmatpush.msra.mxu0 0.0
    %328 = vmatpush.msra.mxu0 %v291
    %329 = vmatpush.msra.mxu0 %v290
    %330 = vmatpush.msra.mxu0 %v289
    %331 = vmatpush.msra.mxu0 %v288
    %332 = vmatmul.f32.gmra.mxu0 %v314
    %v333 = vpop.f32.mrf.mxu0
    %v334 = vadd.f32 0.0, %v333
    %335 = vdwg.mxu0
    %v336 = vld [vmem:[#allocation5] sm:$0xff]
    %v337 = vld [vmem:[#allocation5 + $0x10] sm:$0xff]
    %v338 = vld [vmem:[#allocation5 + $0x20] sm:$0xff]
    %v339 = vld [vmem:[#allocation5 + $0x30] sm:$0xff]
    %v340 = vld [vmem:[#allocation7] sm:$0x1]
    %v342 = vperm.slane %v340, 0
    %347 = vrot.lane.b32.xlu0 %v336, 32
    %v348 = vpop.permute.xlu0 %347
    %349 = vrot.lane.b32.xlu0 %v337, 32
    %v350 = vpop.permute.xlu0 %349
    %351 = vrot.lane.b32.xlu0 %v338, 32
    %v352 = vpop.permute.xlu0 %351
    %353 = vrot.lane.b32.xlu0 %v339, 32
    %v354 = vpop.permute.xlu0 %353
    %359 = vrot.lane.b32.xlu0 %v342, 32
    %v360 = vpop.permute.xlu0 %359
    %v363 = vsel %vm89, %v312, 0
    %v366 = vsel %vm89, %v334, 0
    %368 = vmatpush.msra.mxu0 0.0
    %369 = vmatpush.msra.mxu0 0.0
    %370 = vmatpush.msra.mxu0 0.0
    %371 = vmatpush.msra.mxu0 0.0
    %372 = vmatpush.msra.mxu0 0.0
    %373 = vmatpush.msra.mxu0 0.0
    %374 = vmatpush.msra.mxu0 0.0
    %375 = vmatpush.msra.mxu0 0.0
    %376 = vmatpush.msra.mxu0 0.0
    %377 = vmatpush.msra.mxu0 0.0
    %378 = vmatpush.msra.mxu0 0.0
    %379 = vmatpush.msra.mxu0 0.0
    %380 = vmatpush.msra.mxu0 %v354
    %381 = vmatpush.msra.mxu0 %v352
    %382 = vmatpush.msra.mxu0 %v350
    %383 = vmatpush.msra.mxu0 %v348
    %384 = vmatmul.f32.gmra.mxu0 %v363
    %v385 = vpop.f32.mrf.mxu0
    %v386 = vadd.f32 %v360, %v385
    %387 = vmatmul.f32.gmra.mxu0 %v366
    %v388 = vpop.f32.mrf.mxu0
    %v389 = vadd.f32 %v360, %v388
    %390 = vdwg.mxu0
    %v391 = vadd.f32 %v79, %v386
    %v392 = vadd.f32 %v80, %v389
    %v393 = vld [vmem:[#allocation7 + $0x1] sm:$0x1]
    %v394 = vld [vmem:[#allocation7 + $0x2] sm:$0x1]
    %v395 = vsel %vm89, %v391, 0.0
    %396 = vadd.xlane.f32.xlu0 %v395
    %v397 = vpop.xlane.xlu0 %396
    %v398 = vsel %vm89, %v392, 0.0
    %399 = vadd.xlane.f32.xlu0 %v398
    %v400 = vpop.xlane.xlu0 %399
    %v401 = vrcp.pop 32.0
    %v402 = vmul.f32 32.0, %v401
    %v403 = vsub.f32 1.0, %v402
    %v404 = vmul.f32 %v401, %v403
    %v405 = vadd.f32 %v401, %v404
    %vm406 = vweird.f32 %v401
    %v407 = vsel %vm406, %v401, %v405
    %v408 = vmul.f32 %v397, %v407
    %v409 = vmul.f32 %v400, %v407
    %v410 = vsub.f32 %v391, %v408
    %v411 = vsub.f32 %v392, %v409
    %v412 = vmul.f32 %v410, %v410
    %v413 = vmul.f32 %v411, %v411
    %v414 = vsel %vm89, %v412, 0.0
    %415 = vadd.xlane.f32.xlu0 %v414
    %v416 = vpop.xlane.xlu0 %415
    %v417 = vsel %vm89, %v413, 0.0
    %418 = vadd.xlane.f32.xlu0 %v417
    %v419 = vpop.xlane.xlu0 %418
    %v420 = vrcp.pop 31.0
    %v421 = vmul.f32 31.0, %v420
    %v422 = vsub.f32 1.0, %v421
    %v423 = vmul.f32 %v420, %v422
    %v424 = vadd.f32 %v420, %v423
    %vm425 = vweird.f32 %v420
    %v426 = vsel %vm425, %v420, %v424
    %v427 = vmul.f32 %v416, %v426
    %v428 = vmul.f32 %v419, %v426
    %v429 = vrsqrt.pop %v427
    %v430 = vmul.f32 %v429, %v427
    %v431 = vmul.f32 %v430, %v429
    %v432 = vmul.f32 0.5, %v431
    %v433 = vsub.f32 1.5, %v432
    %v434 = vmul.f32 %v429, %v433
    %v435 = vmul.f32 %v427, %v434
    %vm436 = vcmp.eq.f32.partialorder %v427, inf
    %v437 = vsel %vm436, %v427, %v435
    %vm438 = vcmp.eq.f32.partialorder %v427, 0.0
    %v439 = vand.u32 %v427, 2147483648
    %v440 = vsel %vm438, %v439, %v437
    %v441 = vrsqrt.pop %v428
    %v442 = vmul.f32 %v441, %v428
    %v443 = vmul.f32 %v442, %v441
    %v444 = vmul.f32 0.5, %v443
    %v445 = vsub.f32 1.5, %v444
    %v446 = vmul.f32 %v441, %v445
    %v447 = vmul.f32 %v428, %v446
    %vm448 = vcmp.eq.f32.partialorder %v428, inf
    %v449 = vsel %vm448, %v428, %v447
    %vm450 = vcmp.eq.f32.partialorder %v428, 0.0
    %v451 = vand.u32 %v428, 2147483648
    %v452 = vsel %vm450, %v451, %v449
    %v454 = vperm.slane %v393, 0
    %458 = vrot.lane.b32.xlu0 %v410, 96
    %v459 = vpop.permute.xlu0 %458
    %460 = vrot.lane.b32.xlu0 %v411, 96
    %v461 = vpop.permute.xlu0 %460
    %v464 = vmul.f32 %v454, %v459
    %v465 = vmul.f32 %v454, %v461
    %v466 = vadd.f32 %v440, 1e-06
    %v467 = vadd.f32 %v452, 1e-06
    %v468 = vrcp.pop %v466
    %v469 = vmul.f32 %v466, %v468
    %v470 = vsub.f32 1.0, %v469
    %v471 = vmul.f32 %v468, %v470
    %v472 = vadd.f32 %v468, %v471
    %vm473 = vweird.f32 %v466
    %vm474 = vweird.f32 %v468
    %vm475 = vmor %vm473, %vm474
    %v476 = vsel %vm475, %v468, %v472
    %v477 = vand.u32 2147483647, %v466
    %vm478 = vcmp.eq.f32.partialorder %v477, 8.507059e+37
    %v479 = vand.u32 %v466, 2147483648
    %v480 = vor.u32 1.1754944e-38, %v479
    %v481 = vsel %vm478, %v480, %v476
    %v482 = vmul.f32 %v464, %v481
    %v483 = vrcp.pop %v467
    %v484 = vmul.f32 %v467, %v483
    %v485 = vsub.f32 1.0, %v484
    %v486 = vmul.f32 %v483, %v485
    %v487 = vadd.f32 %v483, %v486
    %vm488 = vweird.f32 %v467
    %vm489 = vweird.f32 %v483
    %vm490 = vmor %vm488, %vm489
    %v491 = vsel %vm490, %v483, %v487
    %v492 = vand.u32 2147483647, %v467
    %vm493 = vcmp.eq.f32.partialorder %v492, 8.507059e+37
    %v494 = vand.u32 %v467, 2147483648
    %v495 = vor.u32 1.1754944e-38, %v494
    %v496 = vsel %vm493, %v495, %v491
    %v497 = vmul.f32 %v465, %v496
    %v499 = vperm.slane %v394, 0
    %500 = vrot.lane.b32.xlu0 %v499, 96
    %v501 = vpop.permute.xlu0 %500
    %v503 = vadd.f32 %v482, %v501
    %v504 = vadd.f32 %v497, %v501
    %v505 = vld [vmem:[#allocation5 + $0x8] sm:$0xff]
    %v506 = vld [vmem:[#allocation5 + $0x18] sm:$0xff]
    %v507 = vld [vmem:[#allocation5 + $0x28] sm:$0xff]
    %v508 = vld [vmem:[#allocation5 + $0x38] sm:$0xff]
    %511 = vrot.lane.b32.xlu0 %v503, 32
    %v512 = vpop.permute.xlu0 %511
    %513 = vrot.lane.b32.xlu0 %v504, 32
    %v514 = vpop.permute.xlu0 %513
    %v515 = vsel %vm89, %v512, 0
    %v517 = vsel %vm89, %v514, 0
    %519 = vmatpush.msra.mxu0 0.0
    %520 = vmatpush.msra.mxu0 0.0
    %521 = vmatpush.msra.mxu0 0.0
    %522 = vmatpush.msra.mxu0 0.0
    %523 = vmatpush.msra.mxu0 0.0
    %524 = vmatpush.msra.mxu0 0.0
    %525 = vmatpush.msra.mxu0 0.0
    %526 = vmatpush.msra.mxu0 0.0
    %527 = vmatpush.msra.mxu0 0.0
    %528 = vmatpush.msra.mxu0 0.0
    %529 = vmatpush.msra.mxu0 0.0
    %530 = vmatpush.msra.mxu0 0.0
    %531 = vmatpush.msra.mxu0 %v508
    %532 = vmatpush.msra.mxu0 %v507
    %533 = vmatpush.msra.mxu0 %v506
    %534 = vmatpush.msra.mxu0 %v505
    %535 = vmatmul.f32.gmra.mxu0 %v515
    %v536 = vpop.f32.mrf.mxu0
    %v537 = vadd.f32 %v454, %v536
    %538 = vmatmul.f32.gmra.mxu0 %v517
    %v539 = vpop.f32.mrf.mxu0
    %v540 = vadd.f32 %v454, %v539
    %541 = vdwg.mxu0
    %v542 = vmul.f32 %v537, 0.5
    %v543 = vmul.f32 %v540, 0.5
    %v544 = vmul.f32 %v537, 0.044715
    %v545 = vmul.f32 %v540, 0.044715
    %v546 = vmul.f32 %v544, %v537
    %v547 = vmul.f32 %v545, %v540
    %v548 = vmul.f32 %v546, %v537
    %v549 = vmul.f32 %v547, %v540
    %v550 = vadd.f32 %v537, %v548
    %v551 = vadd.f32 %v540, %v549
    %v552 = vmul.f32 %v550, 0.7978846
    %v553 = vmul.f32 %v551, 0.7978846
    %v554 = vtanh.pop %v552
    %v555 = vtanh.pop %v553
    %v556 = vadd.f32 %v554, 1.0
    %v557 = vadd.f32 %v555, 1.0
    %v558 = vmul.f32 %v542, %v556
    %v559 = vmul.f32 %v543, %v557
    %564 = vrot.lane.b32.xlu0 %v505, 64
    %v565 = vpop.permute.xlu0 %564
    %566 = vrot.lane.b32.xlu0 %v506, 64
    %v567 = vpop.permute.xlu0 %566
    %568 = vrot.lane.b32.xlu0 %v507, 64
    %v569 = vpop.permute.xlu0 %568
    %570 = vrot.lane.b32.xlu0 %v508, 64
    %v571 = vpop.permute.xlu0 %570
    %572 = vrot.lane.b32.xlu0 %v454, 64
    %v573 = vpop.permute.xlu0 %572
    %vm575 = vcmask 523264
    %v577 = vsel %vm575, %v558, 0
    %v580 = vsel %vm575, %v559, 0
    %v582 = vsel %vm575, %v565, 0
    %v584 = vsel %vm575, %v567, 0
    %v586 = vsel %vm575, %v569, 0
    %v588 = vsel %vm575, %v571, 0
    %590 = vmatpush.xpose.msra.mxu0 0.0
    %591 = vmatpush.xpose.msra.mxu0 0.0
    %592 = vmatpush.xpose.msra.mxu0 0.0
    %593 = vmatpush.xpose.msra.mxu0 0.0
    %594 = vmatpush.xpose.msra.mxu0 0.0
    %595 = vmatpush.xpose.msra.mxu0 0.0
    %596 = vmatpush.xpose.msra.mxu0 0.0
    %597 = vmatpush.xpose.msra.mxu0 0.0
    %598 = vmatpush.xpose.msra.mxu0 0.0
    %599 = vmatpush.xpose.msra.mxu0 0.0
    %600 = vmatpush.xpose.msra.mxu0 0.0
    %601 = vmatpush.xpose.msra.mxu0 0.0
    %602 = vmatpush.xpose.msra.mxu0 %v588
    %603 = vmatpush.xpose.msra.mxu0 %v586
    %604 = vmatpush.xpose.msra.mxu0 %v584
    %605 = vmatpush.xpose.msra.mxu0 %v582
    %606 = vmatmul.f32.gmra.mxu0 %v577
    %v607 = vpop.f32.mrf.mxu0
    %v608 = vadd.f32 %v573, %v607
    %609 = vmatmul.f32.gmra.mxu0 %v580
    %v610 = vpop.f32.mrf.mxu0
    %v611 = vadd.f32 %v573, %v610
    %612 = vdwg.mxu0
    %615 = vrot.lane.b32.xlu0 %v608, 96
    %v616 = vpop.permute.xlu0 %615
    %617 = vrot.lane.b32.xlu0 %v611, 96
    %v618 = vpop.permute.xlu0 %617
    %v621 = vadd.f32 %v503, %v616
    %v622 = vadd.f32 %v504, %v618
    %625 = vrot.lane.b32.xlu0 %v621, 32
    %v626 = vpop.permute.xlu0 %625
    %627 = vrot.lane.b32.xlu0 %v622, 32
    %v628 = vpop.permute.xlu0 %627
    %v631 = vsel %vm89, %v626, 0.0
    %632 = vadd.xlane.f32.xlu0 %v631
    %v633 = vpop.xlane.xlu0 %632
    %v634 = vsel %vm89, %v628, 0.0
    %635 = vadd.xlane.f32.xlu0 %v634
    %v636 = vpop.xlane.xlu0 %635
    %v637 = vmul.f32 %v633, %v407
    %v638 = vmul.f32 %v636, %v407
    %v639 = vsub.f32 %v621, %v637
    %v640 = vsub.f32 %v622, %v638
    %v641 = vmul.f32 %v639, %v639
    %v642 = vmul.f32 %v640, %v640
    %645 = vrot.lane.b32.xlu0 %v641, 32
    %v646 = vpop.permute.xlu0 %645
    %647 = vrot.lane.b32.xlu0 %v642, 32
    %v648 = vpop.permute.xlu0 %647
    %v651 = vsel %vm89, %v646, 0.0
    %652 = vadd.xlane.f32.xlu0 %v651
    %v653 = vpop.xlane.xlu0 %652
    %v654 = vsel %vm89, %v648, 0.0
    %655 = vadd.xlane.f32.xlu0 %v654
    %v656 = vpop.xlane.xlu0 %655
    %v657 = vmul.f32 %v653, %v426
    %v658 = vmul.f32 %v656, %v426
    %v659 = vrsqrt.pop %v657
    %v660 = vmul.f32 %v659, %v657
    %v661 = vmul.f32 %v660, %v659
    %v662 = vmul.f32 0.5, %v661
    %v663 = vsub.f32 1.5, %v662
    %v664 = vmul.f32 %v659, %v663
    %v665 = vmul.f32 %v657, %v664
    %vm666 = vcmp.eq.f32.partialorder %v657, inf
    %v667 = vsel %vm666, %v657, %v665
    %vm668 = vcmp.eq.f32.partialorder %v657, 0.0
    %v669 = vand.u32 %v657, 2147483648
    %v670 = vsel %vm668, %v669, %v667
    %v671 = vrsqrt.pop %v658
    %v672 = vmul.f32 %v671, %v658
    %v673 = vmul.f32 %v672, %v671
    %v674 = vmul.f32 0.5, %v673
    %v675 = vsub.f32 1.5, %v674
    %v676 = vmul.f32 %v671, %v675
    %v677 = vmul.f32 %v658, %v676
    %vm678 = vcmp.eq.f32.partialorder %v658, inf
    %v679 = vsel %vm678, %v658, %v677
    %vm680 = vcmp.eq.f32.partialorder %v658, 0.0
    %v681 = vand.u32 %v658, 2147483648
    %v682 = vsel %vm680, %v681, %v679
    %686 = vrot.lane.b32.xlu0 %v639, 64
    %v687 = vpop.permute.xlu0 %686
    %688 = vrot.lane.b32.xlu0 %v640, 64
    %v689 = vpop.permute.xlu0 %688
    %v692 = vmul.f32 %v499, %v687
    %v693 = vmul.f32 %v499, %v689
    %v694 = vadd.f32 %v670, 1e-06
    %v695 = vadd.f32 %v682, 1e-06
    %v696 = vrcp.pop %v694
    %v697 = vmul.f32 %v694, %v696
    %v698 = vsub.f32 1.0, %v697
    %v699 = vmul.f32 %v696, %v698
    %v700 = vadd.f32 %v696, %v699
    %vm701 = vweird.f32 %v694
    %vm702 = vweird.f32 %v696
    %vm703 = vmor %vm701, %vm702
    %v704 = vsel %vm703, %v696, %v700
    %v705 = vand.u32 2147483647, %v694
    %vm706 = vcmp.eq.f32.partialorder %v705, 8.507059e+37
    %v707 = vand.u32 %v694, 2147483648
    %v708 = vor.u32 1.1754944e-38, %v707
    %v709 = vsel %vm706, %v708, %v704
    %v710 = vmul.f32 %v692, %v709
    %v711 = vrcp.pop %v695
    %v712 = vmul.f32 %v695, %v711
    %v713 = vsub.f32 1.0, %v712
    %v714 = vmul.f32 %v711, %v713
    %v715 = vadd.f32 %v711, %v714
    %vm716 = vweird.f32 %v695
    %vm717 = vweird.f32 %v711
    %vm718 = vmor %vm716, %vm717
    %v719 = vsel %vm718, %v711, %v715
    %v720 = vand.u32 2147483647, %v695
    %vm721 = vcmp.eq.f32.partialorder %v720, 8.507059e+37
    %v722 = vand.u32 %v695, 2147483648
    %v723 = vor.u32 1.1754944e-38, %v722
    %v724 = vsel %vm721, %v723, %v719
    %v725 = vmul.f32 %v693, %v724
    %v726 = vadd.f32 %v710, %v501
    %v727 = vadd.f32 %v725, %v501
    %730 = vrot.lane.b32.xlu0 %v726, 96
    %v731 = vpop.permute.xlu0 %730
    %732 = vrot.lane.b32.xlu0 %v727, 96
    %v733 = vpop.permute.xlu0 %732
    %736 = vst.msk [vmem:[#allocation10] sm:$0xff] %vm89, %v731
    %737 = vst.msk [vmem:[#allocation10 + $0x8] sm:$0xff] %vm89, %v733
    // Predicated region
    $region34: #{encoder_layer.1} parent=1 // pred_check
      _
    $region35: #{encoder_layer.1} parent=1 // pred_check_branch
      %739 = sbr.rel (0) target = $region37
    $region36: #{encoder_layer.1} parent=1 // pred_region
      %741 = vsyncadd [#allocation4], 0
      %s742 = sshll.u32 [#allocation10], 4
      %s743 = int_to_ptr.vmem [resolvable:$true] %s742
      %s744 = sshll.u32 %s4, 4
      %s745 = int_to_ptr.hbm [resolvable:$true] %s744
      %750 = dma.vmem_to_hbm [thread:$0]  %s743, 256, %s745, [#allocation4], 128, 128, 8
    $region37: #{encoder_layer.1} parent=1 // pred_fallthru
      _
    // Predicated region
    $region38: #{encoder_layer.1} parent=1 // pred_check
      _
    $region39: #{encoder_layer.1} parent=1 // pred_check_branch
      %752 = sbr.rel (0) target = $region41
    $region40: #{encoder_layer.1} parent=1 // pred_region
      %754 = dma.done [#allocation4], 256
    $region41: #{encoder_layer.1} parent=1 // pred_fallthru
      _
    %755 = vsyncpa [#allocation3], 1
    %756 = vsyncpa [#allocation6], 1
    %757 = vsyncpa [#allocation9], 1
    %758 = vsyncpa [#allocation4], 1

</llo_original>
